<compile_context>
chip_gen: v7x
topology: tpu7x:2x2x1
jax: 0.10.0
libtpu: 0.0.40
codegen_flags: <defaults>
</compile_context>

<pallas_src>
import functools

import jax
import jax.numpy as jnp
from jax.experimental import pallas as pl
from jax.experimental.pallas import tpu as pltpu


def _round_up(v, m):
    return -(-v // m) * m


# ----------------------------------------------------------------------------
# Fused Pallas kernel: in-kernel im2col (shifted slices) + conv + bias + ReLU
#                      + global average pool.  One grid step = one image.
# ----------------------------------------------------------------------------
def conv_relu_gap_kernel(x_ref, w_ref, b_ref, mask_ref, out_ref, *, W, P, inv_hw):
    """Refs (per grid step):
      x_ref:    (1, Cin, (H+4)*W)  bf16  channel-planar, H padded by 2 rows each
                                         side, spatial flattened (row-major).
      w_ref:    (9, C_SUB, Cin)    bf16  conv weight, tap-major (dh, dw).
      b_ref:    (C_SUB, 1)         f32   conv bias (column vector).
      mask_ref: (2, P)             bf16  0/1 width-edge validity masks
                                         (row 0: w != 0, row 1: w != W-1).
      out_ref:  (1, C_SUB, 1)      f32   pooled (global-avg) features.
    """
    mask_l = mask_ref[0:1, :]            # valid lanes for the dw = -1 taps
    mask_r = mask_ref[1:2, :]            # valid lanes for the dw = +1 taps

    acc = None                           # (C_SUB, P) f32 conv accumulator
    for dh in (-1, 0, 1):
        for dw in (-1, 0, 1):
            t = (dh + 1) * 3 + (dw + 1)
            off = (2 + dh) * W + dw      # static lane shift of the flat image
            xs = x_ref[0, :, off:off + P]            # (Cin, P) bf16 tap
            if dw == -1:
                xs = xs * mask_l                     # zero width wrap-around
            elif dw == 1:
                xs = xs * mask_r
            d = jnp.dot(w_ref[t], xs, preferred_element_type=jnp.float32)
            acc = d if acc is None else acc + d      # f32 accumulation

    feat = jnp.maximum(acc + b_ref[...], 0.0)        # bias + ReLU, f32
    out_ref[0] = jnp.sum(feat, axis=1, keepdims=True) * inv_hw   # global avg


# ----------------------------------------------------------------------------
# pallas_call wrapper: conv + ReLU + global-avg-pool (pooled features out)
# ----------------------------------------------------------------------------
def conv_relu_gap_pallas(x_nchw, conv_w, conv_b):
    B, Cin, H, W = x_nchw.shape
    Cout = conv_w.shape[0]
    C_SUB = _round_up(Cout, 8)           # sublane-aligned output channels
    P = H * W
    Hp = H + 4                           # 2 zero rows of halo on each side
    HpW = Hp * W

    # bf16 image, channel-planar, H-padded, spatially flattened (row-major so
    # tap (dh, dw) is the contiguous slice starting at (2+dh)*W + dw).
    x_flat = jnp.pad(x_nchw.astype(jnp.bfloat16),
                     ((0, 0), (0, 0), (2, 2), (0, 0))).reshape(B, Cin, HpW)

    # Conv weight (Cout, Cin, 3, 3) -> tap-major (9, C_SUB, Cin), zero-padded
    # output channels are inert through bias + ReLU + pooling.
    w9 = jnp.transpose(conv_w, (2, 3, 0, 1)).reshape(9, Cout, Cin)
    w9 = jnp.zeros((9, C_SUB, Cin), jnp.float32).at[:, :Cout, :].set(w9)
    w9 = w9.astype(jnp.bfloat16)
    b_col = jnp.zeros((C_SUB, 1), jnp.float32).at[:Cout, 0].set(conv_b)

    # 0/1 masks killing the width wrap-around of the dw = -1 / +1 taps.
    w_idx = jnp.arange(P, dtype=jnp.int32) % W
    edge_mask = jnp.stack([(w_idx != 0), (w_idx != W - 1)],
                          axis=0).astype(jnp.bfloat16)

    # VMEM guard: double-buffered image block + f32 conv activations per step.
    per_step_bytes = (2 * Cin * HpW * 2 + C_SUB * P * 4
                      + 9 * C_SUB * Cin * 2 + 2 * P * 2)
    assert per_step_bytes < 24 * 1024 * 1024, (
        "image too large for whole-image blocks; add row-halo tiling")

    kernel = functools.partial(conv_relu_gap_kernel, W=W, P=P, inv_hw=1.0 / P)

    flops = B * (2 * 9 * Cin * C_SUB * P + 3 * C_SUB * P)
    # Physical (sublane/lane padded) bytes, bf16 tiles are (16, 128).
    bytes_accessed = (B * _round_up(Cin, 16) * _round_up(HpW, 128) * 2     # x
                      + 9 * _round_up(C_SUB, 16) * _round_up(Cin, 128) * 2 # w
                      + _round_up(C_SUB, 8) * 128 * 4                      # b
                      + _round_up(2, 16) * _round_up(P, 128) * 2           # mask
                      + B * _round_up(C_SUB, 8) * 128 * 4)                 # out

    out = pl.pallas_call(
        kernel,
        out_shape=jax.ShapeDtypeStruct((B, C_SUB, 1), jnp.float32),
        grid_spec=pltpu.PrefetchScalarGridSpec(
            num_scalar_prefetch=0,
            grid=(B,),
            in_specs=[
                pl.BlockSpec((1, Cin, HpW), lambda b: (b, 0, 0)),
                pl.BlockSpec((9, C_SUB, Cin), lambda b: (0, 0, 0)),
                pl.BlockSpec((C_SUB, 1), lambda b: (0, 0)),
                pl.BlockSpec((2, P), lambda b: (0, 0)),
            ],
            out_specs=pl.BlockSpec((1, C_SUB, 1), lambda b: (b, 0, 0)),
        ),
        compiler_params=pltpu.CompilerParams(
            dimension_semantics=("parallel",),      # batch -> megacore
            vmem_limit_bytes=32 * 1024 * 1024,      # safe on v5e/v6e/v7x
        ),
        cost_estimate=pl.CostEstimate(
            flops=flops, transcendentals=0, bytes_accessed=bytes_accessed),
    )(x_flat, w9, b_col, edge_mask)

    return out[:, :Cout, 0]              # (B, Cout) pooled features, f32


# ----------------------------------------------------------------------------
# Glue: parameter setup + wrapper forward (= hooked logits)
# ----------------------------------------------------------------------------
def init_params(key, c_in=4, c_out=8, num_classes=2):
    k1, k2, k3, k4 = jax.random.split(key, 4)
    conv_w = jax.random.normal(k1, (c_out, c_in, 3, 3), jnp.float32) * 0.1
    conv_b = jax.random.normal(k2, (c_out,), jnp.float32) * 0.1
    fc_w = jax.random.normal(k3, (c_out, num_classes), jnp.float32) * 0.1
    fc_b = jax.random.normal(k4, (num_classes,), jnp.float32) * 0.1
    return conv_w, conv_b, fc_w, fc_b


@jax.jit
def model_output_logits_wrapper_forward(x_nchw, params):
    """Equivalent of ModelOutputLogitsWrapper.forward: run the model, return
    the tensor captured at the logits hook point (= final Linear output)."""
    conv_w, conv_b, fc_w, fc_b = params
    pooled = conv_relu_gap_pallas(x_nchw, conv_w, conv_b)          # (B, Cout)
    # Tiny (B, Cout) @ (Cout, n_cls) FC done in XLA (reviewer: drop in-kernel FC).
    return jnp.dot(pooled, fc_w, precision=jax.lax.Precision.HIGHEST) + fc_b


# ----------------------------------------------------------------------------
# Reference (independent code path; mirrors the kernel's bf16 input rounding)
# ----------------------------------------------------------------------------
def reference_forward(x_nchw, params):
    conv_w, conv_b, fc_w, fc_b = params
    hp = jax.lax.Precision.HIGHEST
    xb = x_nchw.astype(jnp.bfloat16).astype(jnp.float32)
    wb = conv_w.astype(jnp.bfloat16).astype(jnp.float32)
    feat = jax.lax.conv_general_dilated(
        xb, wb, window_strides=(1, 1), padding="SAME",
        dimension_numbers=("NCHW", "OIHW", "NCHW"), precision=hp)
    feat = jnp.maximum(feat + conv_b[None, :, None, None], 0.0)
    pooled = feat.mean(axis=(2, 3))
    return jnp.dot(pooled, fc_w, precision=hp) + fc_b


if __name__ == "__main__":
    key = jax.random.PRNGKey(0)
    k_x, k_p = jax.random.split(key)

    B, C, H, W = 2, 4, 16, 16
    x = jax.random.normal(k_x, (B, C, H, W), jnp.float32)      # NCHW input
    params = init_params(k_p, c_in=C, c_out=8, num_classes=2)

    logits = model_output_logits_wrapper_forward(x, params)
    logits = jax.block_until_ready(logits)

    ref = reference_forward(x, params)
    assert logits.shape == (B, 2)
    assert jnp.allclose(logits, ref, atol=1e-3, rtol=1e-3), (logits, ref)

    print("KERNEL_OK")
</pallas_src>

<mosaic_0001>
module attributes {stable_mosaic.version = 11 : i64} {
  func.func @conv_relu_gap_kernel(%arg0: i32, %arg1: memref<1x4x320xbf16, #tpu.memory_space<vmem>>, %arg2: memref<9x8x4xbf16, #tpu.memory_space<vmem>>, %arg3: memref<8x1xf32, #tpu.memory_space<vmem>>, %arg4: memref<2x256xbf16, #tpu.memory_space<vmem>>, %arg5: memref<1x8x1xf32, #tpu.memory_space<vmem>>) attributes {dimension_semantics = [#tpu.dimension_semantics<parallel>], iteration_bounds = array<i64: 2>, scalar_prefetch = 0 : i64, scratch_operands = 0 : i64, tpu.core_type = #tpu.core_type<tc>, window_params = [{transform_indices = @transform_0, window_bounds = array<i64: 1, 4, 320>}, {pipeline_mode = #tpu.pipeline_mode<synchronous>, transform_indices = @transform_1, window_bounds = array<i64: 9, 8, 4>}, {pipeline_mode = #tpu.pipeline_mode<synchronous>, transform_indices = @transform_2, window_bounds = array<i64: 8, 1>}, {pipeline_mode = #tpu.pipeline_mode<synchronous>, transform_indices = @transform_3, window_bounds = array<i64: 2, 256>}, {transform_indices = @transform_4, window_bounds = array<i64: 1, 8, 1>}]} {
    %c0 = arith.constant 0 : index
    %c0_0 = arith.constant 0 : index
    %0 = vector.load %arg4[%c0, %c0_0] : memref<2x256xbf16, #tpu.memory_space<vmem>>, vector<1x256xbf16>
    %c1 = arith.constant 1 : index
    %c0_1 = arith.constant 0 : index
    %1 = vector.load %arg4[%c1, %c0_1] : memref<2x256xbf16, #tpu.memory_space<vmem>>, vector<1x256xbf16>
    %c0_2 = arith.constant 0 : index
    %c0_3 = arith.constant 0 : index
    %c15 = arith.constant 15 : index
    %2 = vector.load %arg1[%c0_2, %c0_3, %c15] : memref<1x4x320xbf16, #tpu.memory_space<vmem>>, vector<1x4x256xbf16>
    %3 = vector.shape_cast %2 : vector<1x4x256xbf16> to vector<4x256xbf16>
    %4 = vector.broadcast %0 : vector<1x256xbf16> to vector<4x256xbf16>
    %5 = arith.mulf %3, %4 : vector<4x256xbf16>
    %c0_4 = arith.constant 0 : index
    %c0_5 = arith.constant 0 : index
    %c0_6 = arith.constant 0 : index
    %6 = vector.load %arg2[%c0_4, %c0_5, %c0_6] : memref<9x8x4xbf16, #tpu.memory_space<vmem>>, vector<1x8x4xbf16>
    %7 = vector.shape_cast %6 : vector<1x8x4xbf16> to vector<8x4xbf16>
    %cst = arith.constant dense<0.000000e+00> : vector<8x256xf32>
    %8 = tpu.matmul %7, %5, %cst {dimension_numbers = #tpu.dot_dimension_numbers<[1], [0], [0], [1], [0, 0, 1, 1], [], []>} : vector<8x4xbf16>, vector<4x256xbf16>, vector<8x256xf32> -> vector<8x256xf32>
    %c0_7 = arith.constant 0 : index
    %c0_8 = arith.constant 0 : index
    %c16 = arith.constant 16 : index
    %9 = vector.load %arg1[%c0_7, %c0_8, %c16] : memref<1x4x320xbf16, #tpu.memory_space<vmem>>, vector<1x4x256xbf16>
    %10 = vector.shape_cast %9 : vector<1x4x256xbf16> to vector<4x256xbf16>
    %c1_9 = arith.constant 1 : index
    %c0_10 = arith.constant 0 : index
    %c0_11 = arith.constant 0 : index
    %11 = vector.load %arg2[%c1_9, %c0_10, %c0_11] : memref<9x8x4xbf16, #tpu.memory_space<vmem>>, vector<1x8x4xbf16>
    %12 = vector.shape_cast %11 : vector<1x8x4xbf16> to vector<8x4xbf16>
    %cst_12 = arith.constant dense<0.000000e+00> : vector<8x256xf32>
    %13 = tpu.matmul %12, %10, %cst_12 {dimension_numbers = #tpu.dot_dimension_numbers<[1], [0], [0], [1], [0, 0, 1, 1], [], []>} : vector<8x4xbf16>, vector<4x256xbf16>, vector<8x256xf32> -> vector<8x256xf32>
    %14 = arith.addf %8, %13 : vector<8x256xf32>
    %c0_13 = arith.constant 0 : index
    %c0_14 = arith.constant 0 : index
    %c17 = arith.constant 17 : index
    %15 = vector.load %arg1[%c0_13, %c0_14, %c17] : memref<1x4x320xbf16, #tpu.memory_space<vmem>>, vector<1x4x256xbf16>
    %16 = vector.shape_cast %15 : vector<1x4x256xbf16> to vector<4x256xbf16>
    %17 = vector.broadcast %1 : vector<1x256xbf16> to vector<4x256xbf16>
    %18 = arith.mulf %16, %17 : vector<4x256xbf16>
    %c2 = arith.constant 2 : index
    %c0_15 = arith.constant 0 : index
    %c0_16 = arith.constant 0 : index
    %19 = vector.load %arg2[%c2, %c0_15, %c0_16] : memref<9x8x4xbf16, #tpu.memory_space<vmem>>, vector<1x8x4xbf16>
    %20 = vector.shape_cast %19 : vector<1x8x4xbf16> to vector<8x4xbf16>
    %cst_17 = arith.constant dense<0.000000e+00> : vector<8x256xf32>
    %21 = tpu.matmul %20, %18, %cst_17 {dimension_numbers = #tpu.dot_dimension_numbers<[1], [0], [0], [1], [0, 0, 1, 1], [], []>} : vector<8x4xbf16>, vector<4x256xbf16>, vector<8x256xf32> -> vector<8x256xf32>
    %22 = arith.addf %14, %21 : vector<8x256xf32>
    %c0_18 = arith.constant 0 : index
    %c0_19 = arith.constant 0 : index
    %c31 = arith.constant 31 : index
    %23 = vector.load %arg1[%c0_18, %c0_19, %c31] : memref<1x4x320xbf16, #tpu.memory_space<vmem>>, vector<1x4x256xbf16>
    %24 = vector.shape_cast %23 : vector<1x4x256xbf16> to vector<4x256xbf16>
    %25 = vector.broadcast %0 : vector<1x256xbf16> to vector<4x256xbf16>
    %26 = arith.mulf %24, %25 : vector<4x256xbf16>
    %c3 = arith.constant 3 : index
    %c0_20 = arith.constant 0 : index
    %c0_21 = arith.constant 0 : index
    %27 = vector.load %arg2[%c3, %c0_20, %c0_21] : memref<9x8x4xbf16, #tpu.memory_space<vmem>>, vector<1x8x4xbf16>
    %28 = vector.shape_cast %27 : vector<1x8x4xbf16> to vector<8x4xbf16>
    %cst_22 = arith.constant dense<0.000000e+00> : vector<8x256xf32>
    %29 = tpu.matmul %28, %26, %cst_22 {dimension_numbers = #tpu.dot_dimension_numbers<[1], [0], [0], [1], [0, 0, 1, 1], [], []>} : vector<8x4xbf16>, vector<4x256xbf16>, vector<8x256xf32> -> vector<8x256xf32>
    %30 = arith.addf %22, %29 : vector<8x256xf32>
    %c0_23 = arith.constant 0 : index
    %c0_24 = arith.constant 0 : index
    %c32 = arith.constant 32 : index
    %31 = vector.load %arg1[%c0_23, %c0_24, %c32] : memref<1x4x320xbf16, #tpu.memory_space<vmem>>, vector<1x4x256xbf16>
    %32 = vector.shape_cast %31 : vector<1x4x256xbf16> to vector<4x256xbf16>
    %c4 = arith.constant 4 : index
    %c0_25 = arith.constant 0 : index
    %c0_26 = arith.constant 0 : index
    %33 = vector.load %arg2[%c4, %c0_25, %c0_26] : memref<9x8x4xbf16, #tpu.memory_space<vmem>>, vector<1x8x4xbf16>
    %34 = vector.shape_cast %33 : vector<1x8x4xbf16> to vector<8x4xbf16>
    %cst_27 = arith.constant dense<0.000000e+00> : vector<8x256xf32>
    %35 = tpu.matmul %34, %32, %cst_27 {dimension_numbers = #tpu.dot_dimension_numbers<[1], [0], [0], [1], [0, 0, 1, 1], [], []>} : vector<8x4xbf16>, vector<4x256xbf16>, vector<8x256xf32> -> vector<8x256xf32>
    %36 = arith.addf %30, %35 : vector<8x256xf32>
    %c0_28 = arith.constant 0 : index
    %c0_29 = arith.constant 0 : index
    %c33 = arith.constant 33 : index
    %37 = vector.load %arg1[%c0_28, %c0_29, %c33] : memref<1x4x320xbf16, #tpu.memory_space<vmem>>, vector<1x4x256xbf16>
    %38 = vector.shape_cast %37 : vector<1x4x256xbf16> to vector<4x256xbf16>
    %39 = vector.broadcast %1 : vector<1x256xbf16> to vector<4x256xbf16>
    %40 = arith.mulf %38, %39 : vector<4x256xbf16>
    %c5 = arith.constant 5 : index
    %c0_30 = arith.constant 0 : index
    %c0_31 = arith.constant 0 : index
    %41 = vector.load %arg2[%c5, %c0_30, %c0_31] : memref<9x8x4xbf16, #tpu.memory_space<vmem>>, vector<1x8x4xbf16>
    %42 = vector.shape_cast %41 : vector<1x8x4xbf16> to vector<8x4xbf16>
    %cst_32 = arith.constant dense<0.000000e+00> : vector<8x256xf32>
    %43 = tpu.matmul %42, %40, %cst_32 {dimension_numbers = #tpu.dot_dimension_numbers<[1], [0], [0], [1], [0, 0, 1, 1], [], []>} : vector<8x4xbf16>, vector<4x256xbf16>, vector<8x256xf32> -> vector<8x256xf32>
    %44 = arith.addf %36, %43 : vector<8x256xf32>
    %c0_33 = arith.constant 0 : index
    %c0_34 = arith.constant 0 : index
    %c47 = arith.constant 47 : index
    %45 = vector.load %arg1[%c0_33, %c0_34, %c47] : memref<1x4x320xbf16, #tpu.memory_space<vmem>>, vector<1x4x256xbf16>
    %46 = vector.shape_cast %45 : vector<1x4x256xbf16> to vector<4x256xbf16>
    %47 = vector.broadcast %0 : vector<1x256xbf16> to vector<4x256xbf16>
    %48 = arith.mulf %46, %47 : vector<4x256xbf16>
    %c6 = arith.constant 6 : index
    %c0_35 = arith.constant 0 : index
    %c0_36 = arith.constant 0 : index
    %49 = vector.load %arg2[%c6, %c0_35, %c0_36] : memref<9x8x4xbf16, #tpu.memory_space<vmem>>, vector<1x8x4xbf16>
    %50 = vector.shape_cast %49 : vector<1x8x4xbf16> to vector<8x4xbf16>
    %cst_37 = arith.constant dense<0.000000e+00> : vector<8x256xf32>
    %51 = tpu.matmul %50, %48, %cst_37 {dimension_numbers = #tpu.dot_dimension_numbers<[1], [0], [0], [1], [0, 0, 1, 1], [], []>} : vector<8x4xbf16>, vector<4x256xbf16>, vector<8x256xf32> -> vector<8x256xf32>
    %52 = arith.addf %44, %51 : vector<8x256xf32>
    %c0_38 = arith.constant 0 : index
    %c0_39 = arith.constant 0 : index
    %c48 = arith.constant 48 : index
    %53 = vector.load %arg1[%c0_38, %c0_39, %c48] : memref<1x4x320xbf16, #tpu.memory_space<vmem>>, vector<1x4x256xbf16>
    %54 = vector.shape_cast %53 : vector<1x4x256xbf16> to vector<4x256xbf16>
    %c7 = arith.constant 7 : index
    %c0_40 = arith.constant 0 : index
    %c0_41 = arith.constant 0 : index
    %55 = vector.load %arg2[%c7, %c0_40, %c0_41] : memref<9x8x4xbf16, #tpu.memory_space<vmem>>, vector<1x8x4xbf16>
    %56 = vector.shape_cast %55 : vector<1x8x4xbf16> to vector<8x4xbf16>
    %cst_42 = arith.constant dense<0.000000e+00> : vector<8x256xf32>
    %57 = tpu.matmul %56, %54, %cst_42 {dimension_numbers = #tpu.dot_dimension_numbers<[1], [0], [0], [1], [0, 0, 1, 1], [], []>} : vector<8x4xbf16>, vector<4x256xbf16>, vector<8x256xf32> -> vector<8x256xf32>
    %58 = arith.addf %52, %57 : vector<8x256xf32>
    %c0_43 = arith.constant 0 : index
    %c0_44 = arith.constant 0 : index
    %c49 = arith.constant 49 : index
    %59 = vector.load %arg1[%c0_43, %c0_44, %c49] : memref<1x4x320xbf16, #tpu.memory_space<vmem>>, vector<1x4x256xbf16>
    %60 = vector.shape_cast %59 : vector<1x4x256xbf16> to vector<4x256xbf16>
    %61 = vector.broadcast %1 : vector<1x256xbf16> to vector<4x256xbf16>
    %62 = arith.mulf %60, %61 : vector<4x256xbf16>
    %c8 = arith.constant 8 : index
    %c0_45 = arith.constant 0 : index
    %c0_46 = arith.constant 0 : index
    %63 = vector.load %arg2[%c8, %c0_45, %c0_46] : memref<9x8x4xbf16, #tpu.memory_space<vmem>>, vector<1x8x4xbf16>
    %64 = vector.shape_cast %63 : vector<1x8x4xbf16> to vector<8x4xbf16>
    %cst_47 = arith.constant dense<0.000000e+00> : vector<8x256xf32>
    %65 = tpu.matmul %64, %62, %cst_47 {dimension_numbers = #tpu.dot_dimension_numbers<[1], [0], [0], [1], [0, 0, 1, 1], [], []>} : vector<8x4xbf16>, vector<4x256xbf16>, vector<8x256xf32> -> vector<8x256xf32>
    %66 = arith.addf %58, %65 : vector<8x256xf32>
    %c0_48 = arith.constant 0 : index
    %c0_49 = arith.constant 0 : index
    %67 = vector.load %arg3[%c0_48, %c0_49] : memref<8x1xf32, #tpu.memory_space<vmem>>, vector<8x1xf32>
    %68 = vector.broadcast %67 : vector<8x1xf32> to vector<8x256xf32>
    %69 = arith.addf %66, %68 : vector<8x256xf32>
    %cst_50 = arith.constant 0.000000e+00 : f32
    %70 = vector.broadcast %cst_50 : f32 to vector<8x256xf32>
    %71 = arith.maximumf %69, %70 : vector<8x256xf32>
    %cst_51 = arith.constant dense<0.000000e+00> : vector<8xf32>
    %72 = vector.multi_reduction <add>, %71, %cst_51 [1] : vector<8x256xf32> to vector<8xf32>
    %73 = vector.shape_cast %72 : vector<8xf32> to vector<8x1xf32>
    %cst_52 = arith.constant 3.906250e-03 : f32
    %74 = vector.broadcast %cst_52 : f32 to vector<8x1xf32>
    %75 = arith.mulf %73, %74 : vector<8x1xf32>
    %c0_53 = arith.constant 0 : index
    %c0_54 = arith.constant 0 : index
    %c0_55 = arith.constant 0 : index
    %76 = vector.load %arg5[%c0_53, %c0_54, %c0_55] : memref<1x8x1xf32, #tpu.memory_space<vmem>>, vector<1x8x1xf32>
    %77 = vector.shape_cast %76 : vector<1x8x1xf32> to vector<8x1xf32>
    %78 = vector.shape_cast %75 : vector<8x1xf32> to vector<1x8x1xf32>
    tpu.vector_store %arg5[%c0_53, %c0_54, %c0_55], %78 {strides = array<i32>} : memref<1x8x1xf32, #tpu.memory_space<vmem>>, vector<1x8x1xf32>,
    return
  }
  func.func @transform_0(%arg0: i32) -> (i32, i32, i32) {
    %c0_i32 = arith.constant 0 : i32
    %c0_i32_0 = arith.constant 0 : i32
    %c0_i32_1 = arith.constant 0 : i32
    return %arg0, %c0_i32, %c0_i32_0 : i32, i32, i32
  }
  func.func @transform_1(%arg0: i32) -> (i32, i32, i32) {
    %c0_i32 = arith.constant 0 : i32
    %c0_i32_0 = arith.constant 0 : i32
    %c0_i32_1 = arith.constant 0 : i32
    %c0_i32_2 = arith.constant 0 : i32
    return %c0_i32, %c0_i32_0, %c0_i32_1 : i32, i32, i32
  }
  func.func @transform_2(%arg0: i32) -> (i32, i32) {
    %c0_i32 = arith.constant 0 : i32
    %c0_i32_0 = arith.constant 0 : i32
    %c0_i32_1 = arith.constant 0 : i32
    return %c0_i32, %c0_i32_0 : i32, i32
  }
  func.func @transform_3(%arg0: i32) -> (i32, i32) {
    %c0_i32 = arith.constant 0 : i32
    %c0_i32_0 = arith.constant 0 : i32
    %c0_i32_1 = arith.constant 0 : i32
    return %c0_i32, %c0_i32_0 : i32, i32
  }
  func.func @transform_4(%arg0: i32) -> (i32, i32, i32) {
    %c0_i32 = arith.constant 0 : i32
    %c0_i32_0 = arith.constant 0 : i32
    %c0_i32_1 = arith.constant 0 : i32
    return %arg0, %c0_i32, %c0_i32_0 : i32, i32, i32
  }
}

</mosaic_0001>

<llo_original>
// kernel: model_output_logits_wrapper_forward.1
$region0: #{model_output_logits_wrapper_forward.1}
  #allocation0 [shape = 'u32[]', space=smem, size = 0x4, offset = 0x4, fixed_abs, tag = 'smem constant byte address 0x4 - core index']
  #allocation1 [shape = 'u32[144,128]{1,0:T(1,128)}', space=vmem, size = 0x12000, scoped, tag = 'internal scratch']
  %s0 = inlined_call_operand.vmem [shape: bf16[2,4,320], index: 0, kind: input, shape index: {}]
  %s1 = inlined_call_operand.vmem [shape: bf16[9,8,4], index: 1, kind: input, shape index: {}]
  %s2 = inlined_call_operand.vmem [shape: f32[8,1], index: 2, kind: input, shape index: {}]
  %s3 = inlined_call_operand.vmem [shape: bf16[2,256], index: 3, kind: input, shape index: {}]
  %s4 = inlined_call_operand.vmem [shape: f32[2,8,1], index: 4, kind: output, shape index: {}]
  %s5 = sld [smem:[#allocation0]]
  $region49: #{model_output_logits_wrapper_forward.1} parent=0
    _
  %s7 = ssub.s32 1, %s5
  %s8 = scalar_select 0, %s7, %s5
  loop: start=0, step=1, limit=4
  $region2: #{model_output_logits_wrapper_forward.1} parent=0 // loop_pre_header
    _
  $region3: #{model_output_logits_wrapper_forward.1} parent=0 // loop_header
    %s10 = sphi 0, %s14
    %p11 = scmp.ge.s32.totalorder %s10, 4
    %s20 = sphi 0, %s22
    %s23 = sphi 0, %s20
    %s24 = sphi 0, %s23
    %s40 = sphi 0, %s24
    %s44 = sphi 0, %s44
    %s46 = sphi 0, %s44
    %s47 = sphi 0, %s46
    %s61 = sphi 0, %s47
    %s65 = sphi 0, %s65
    %s67 = sphi 0, %s65
    %s68 = sphi 0, %s67
    %s82 = sphi 0, %s68
    %s86 = sphi 0, %s86
    %s88 = sphi 0, %s86
    %s89 = sphi 0, %s88
    %s103 = sphi 0, %s89
    %s109 = sphi 0, %s111
    %s112 = sphi 0, %s109
    %s113 = sphi 0, %s112
    %s129 = sphi 0, %s113
  $region4: #{model_output_logits_wrapper_forward.1} parent=0 // loop_header_branch
    %13 = sbr.rel (%p11) target = $region8
  $region5: #{model_output_logits_wrapper_forward.1} parent=0 // loop_body
    %s15 = ssub.s32 %s10, 1
    %s16 = ssub.s32 %s10, 2
    %s17 = sadd.s32 %s10, 1
    %s18 = ssub.s32 %s10, %s17
    %p19 = scmp.eq.s32.totalorder %s18, 0
    %s21 = sadd.s32 %s20, 1
    %s22 = scalar_select %p19, %s20, %s21
    %p25 = pneg %p19
    %p26 = scmp.eq.s32.totalorder %s10, 1
    %p27 = por %p25, %p26
    %p28 = scmp.ne.s32.totalorder %s20, %s23
    %p29 = scmp.eq.s32.totalorder %s10, 0
    %p30 = por %p28, %p29
    %p31 = scmp.ne.s32.totalorder %s20, %s23
    %p32 = scmp.eq.s32.totalorder %s15, 1
    %p33 = por %p31, %p32
    %p34 = scmp.ne.s32.totalorder %s23, %s24
    %p35 = scmp.eq.s32.totalorder %s15, 0
    %p36 = por %p34, %p35
    %p37 = scmp.ne.s32.totalorder %s23, %s24
    %p38 = scmp.eq.s32.totalorder %s16, 1
    %p39 = por %p37, %p38
    %p41 = scmp.ne.s32.totalorder %s24, %s40
    %p42 = scmp.eq.s32.totalorder %s16, 0
    %p43 = por %p41, %p42
    %s45 = sadd.s32 %s44, 1
    %p48 = scmp.eq.s32.totalorder %s10, 1
    %p49 = scmp.ne.s32.totalorder %s44, %s46
    %p50 = scmp.eq.s32.totalorder %s10, 0
    %p51 = por %p49, %p50
    %p52 = scmp.ne.s32.totalorder %s44, %s46
    %p53 = scmp.eq.s32.totalorder %s15, 1
    %p54 = por %p52, %p53
    %p55 = scmp.ne.s32.totalorder %s46, %s47
    %p56 = scmp.eq.s32.totalorder %s15, 0
    %p57 = por %p55, %p56
    %p58 = scmp.ne.s32.totalorder %s46, %s47
    %p59 = scmp.eq.s32.totalorder %s16, 1
    %p60 = por %p58, %p59
    %p62 = scmp.ne.s32.totalorder %s47, %s61
    %p63 = scmp.eq.s32.totalorder %s16, 0
    %p64 = por %p62, %p63
    %s66 = sadd.s32 %s65, 1
    %p69 = scmp.eq.s32.totalorder %s10, 1
    %p70 = scmp.ne.s32.totalorder %s65, %s67
    %p71 = scmp.eq.s32.totalorder %s10, 0
    %p72 = por %p70, %p71
    %p73 = scmp.ne.s32.totalorder %s65, %s67
    %p74 = scmp.eq.s32.totalorder %s15, 1
    %p75 = por %p73, %p74
    %p76 = scmp.ne.s32.totalorder %s67, %s68
    %p77 = scmp.eq.s32.totalorder %s15, 0
    %p78 = por %p76, %p77
    %p79 = scmp.ne.s32.totalorder %s67, %s68
    %p80 = scmp.eq.s32.totalorder %s16, 1
    %p81 = por %p79, %p80
    %p83 = scmp.ne.s32.totalorder %s68, %s82
    %p84 = scmp.eq.s32.totalorder %s16, 0
    %p85 = por %p83, %p84
    %s87 = sadd.s32 %s86, 1
    %p90 = scmp.eq.s32.totalorder %s10, 1
    %p91 = scmp.ne.s32.totalorder %s86, %s88
    %p92 = scmp.eq.s32.totalorder %s10, 0
    %p93 = por %p91, %p92
    %p94 = scmp.ne.s32.totalorder %s86, %s88
    %p95 = scmp.eq.s32.totalorder %s15, 1
    %p96 = por %p94, %p95
    %p97 = scmp.ne.s32.totalorder %s88, %s89
    %p98 = scmp.eq.s32.totalorder %s15, 0
    %p99 = por %p97, %p98
    %p100 = scmp.ne.s32.totalorder %s88, %s89
    %p101 = scmp.eq.s32.totalorder %s16, 1
    %p102 = por %p100, %p101
    %p104 = scmp.ne.s32.totalorder %s89, %s103
    %p105 = scmp.eq.s32.totalorder %s16, 0
    %p106 = por %p104, %p105
    %s107 = ssub.s32 %s10, %s17
    %p108 = scmp.eq.s32.totalorder %s107, 0
    %s110 = sadd.s32 %s109, 1
    %s111 = scalar_select %p108, %s109, %s110
    %p114 = pneg %p108
    %p115 = scmp.eq.s32.totalorder %s10, 1
    %p116 = por %p114, %p115
    %p117 = scmp.ne.s32.totalorder %s109, %s112
    %p118 = scmp.eq.s32.totalorder %s10, 0
    %p119 = por %p117, %p118
    %p120 = scmp.ne.s32.totalorder %s109, %s112
    %p121 = scmp.eq.s32.totalorder %s15, 1
    %p122 = por %p120, %p121
    %p123 = scmp.ne.s32.totalorder %s112, %s113
    %p124 = scmp.eq.s32.totalorder %s15, 0
    %p125 = por %p123, %p124
    %p126 = scmp.ne.s32.totalorder %s112, %s113
    %p127 = scmp.eq.s32.totalorder %s16, 1
    %p128 = por %p126, %p127
    %p130 = scmp.ne.s32.totalorder %s113, %s129
    %p131 = scmp.eq.s32.totalorder %s16, 0
    %p132 = por %p130, %p131
    %p133 = scmp.le.s32.totalorder 1, %s10
    %p134 = scmp.lt.s32.totalorder %s10, 3
    %p135 = pnand %p133, %p134
    %p136 = pneg %p135
    // Predicated region
    $region9: #{model_output_logits_wrapper_forward.1} parent=5 // pred_check
      _
    $region10: #{model_output_logits_wrapper_forward.1} parent=5 // pred_check_branch
      %138 = sbr.rel (%p135) target = $region12
    $region11: #{model_output_logits_wrapper_forward.1} parent=5 // pred_region
      %s139 = ssub.s32 %s10, 1
      // Predicated region
      $region13: #{model_output_logits_wrapper_forward.1} parent=11 // pred_check
        %p140 = pneg %p57
      $region14: #{model_output_logits_wrapper_forward.1} parent=11 // pred_check_branch
        %142 = sbr.rel (%p140) target = $region16
      $region15: #{model_output_logits_wrapper_forward.1} parent=11 // pred_region
        _
      $region16: #{model_output_logits_wrapper_forward.1} parent=11 // pred_fallthru
        _
      // Predicated region
      $region17: #{model_output_logits_wrapper_forward.1} parent=11 // pred_check
        %p143 = pneg %p78
      $region18: #{model_output_logits_wrapper_forward.1} parent=11 // pred_check_branch
        %145 = sbr.rel (%p143) target = $region20
      $region19: #{model_output_logits_wrapper_forward.1} parent=11 // pred_region
        _
      $region20: #{model_output_logits_wrapper_forward.1} parent=11 // pred_fallthru
        _
      // Predicated region
      $region21: #{model_output_logits_wrapper_forward.1} parent=11 // pred_check
        %p146 = pneg %p99
      $region22: #{model_output_logits_wrapper_forward.1} parent=11 // pred_check_branch
        %148 = sbr.rel (%p146) target = $region24
      $region23: #{model_output_logits_wrapper_forward.1} parent=11 // pred_region
        _
      $region24: #{model_output_logits_wrapper_forward.1} parent=11 // pred_fallthru
        _
    $region12: #{model_output_logits_wrapper_forward.1} parent=5 // pred_fallthru
      _
    %p149 = scmp.lt.s32.totalorder %s10, 2
    // Predicated region
    $region25: #{model_output_logits_wrapper_forward.1} parent=5 // pred_check
      %p150 = pneg %p149
    $region26: #{model_output_logits_wrapper_forward.1} parent=5 // pred_check_branch
      %152 = sbr.rel (%p150) target = $region28
    $region27: #{model_output_logits_wrapper_forward.1} parent=5 // pred_region
      // Predicated region
      $region29: #{model_output_logits_wrapper_forward.1} parent=27 // pred_check
        %p153 = pneg %p30
      $region30: #{model_output_logits_wrapper_forward.1} parent=27 // pred_check_branch
        %155 = sbr.rel (%p153) target = $region32
      $region31: #{model_output_logits_wrapper_forward.1} parent=27 // pred_region
        %p156 = scmp.lt.s32.totalorder %s10, 1
        %s157 = scalar_select %p156, %s10, 1
        %s158 = smul.addr %s157, 3
        %s159 = smul.addr %s158, 2
        %s160 = scalar_lea.vmem %s0, %s159
      $region32: #{model_output_logits_wrapper_forward.1} parent=27 // pred_fallthru
        _
    $region28: #{model_output_logits_wrapper_forward.1} parent=5 // pred_fallthru
      _
    %p161 = scmp.le.s32.totalorder 1, %s10
    %p162 = scmp.lt.s32.totalorder %s10, 3
    %p163 = pnand %p161, %p162
    %p164 = pneg %p163
    // Predicated region
    $region33: #{model_output_logits_wrapper_forward.1} parent=5 // pred_check
      _
    $region34: #{model_output_logits_wrapper_forward.1} parent=5 // pred_check_branch
      %166 = sbr.rel (%p163) target = $region36
    $region35: #{model_output_logits_wrapper_forward.1} parent=5 // pred_region
      %s167 = ssub.s32 %s10, 1
      %p168 = scmp.lt.s32.totalorder %s15, 1
      %s169 = scalar_select %p168, %s15, 1
      %s170 = smul.addr %s169, 3
      %s171 = smul.addr %s170, 2
      %s172 = scalar_lea.vmem %s0, %s171
      %p173 = pneg %p36
      %p174 = pneg %p33
      %p175 = pneg %p57
      %p176 = pneg %p54
      %p177 = pneg %p78
      %p178 = pneg %p75
      %p179 = pneg %p99
      %p180 = pneg %p96
      %p181 = pneg %p125
      %p182 = pneg %p122
      %p183 = scmp.lt.s32.totalorder %s15, 1
      %s184 = scalar_select %p183, %s15, 1
      %s185 = smul.addr %s184, 8
      %s186 = scalar_lea.vmem %s4, %s185
      %p187 = scmp.lt.s32.totalorder %s15, 1
      %s188 = scalar_select %p187, %s15, 1
      %s189 = smul.addr %s188, 3
      %s190 = smul.addr %s189, 2
      %s191 = scalar_lea.vmem %s0, %s190
      %p192 = scmp.lt.s32.totalorder %s15, 1
      %s193 = scalar_select %p192, %s15, 1
      %s194 = smul.addr %s193, 8
      %s195 = scalar_lea.vmem %s4, %s194
      %v197 = vld [vmem:[%s3] sm:$0x3]
      %v198 = vld [vmem:[%s191] sm:$0x3f]
      %v201 = vunpack.c.l.s4 1966171168
      %v202 = vunpack.c.0.s8 %v201
      %v203 = vlaneseq
      %v204 = vshrl.u32 %v203, 7
      %v205 = vsub.s32 %v202, %v204
      %v206 = vrot.slane %v197, %v205
      %v207 = vcombine.high %v206, %v206
      %v209 = vunpack.c.l.s4 1966171168
      %v210 = vunpack.c.0.s8 %v209
      %v211 = vlaneseq
      %v212 = vshrl.u32 %v211, 7
      %v213 = vsub.s32 %v210, %v212
      %v214 = vrot.slane %v206, %v213
      %v216 = vunpack.c.l.s4 1966171168
      %v217 = vunpack.c.0.s8 %v216
      %v218 = vlaneseq
      %v219 = vshrl.u32 %v218, 7
      %v220 = vsub.s32 %v217, %v219
      %v221 = vrot.slane %v207, %v220
      %v223 = vpack.i.b16 %v214, %v214
      %v225 = vlaneseq
      %v226 = vshrl.u32 %v225, 7
      %v227 = vsub.s32 0, %v226
      %v228 = vrot.slane %v223, %v227
      %v230 = vpack.i.b16 %v221, %v221
      %v232 = vlaneseq
      %v233 = vshrl.u32 %v232, 7
      %v234 = vsub.s32 0, %v233
      %v235 = vrot.slane %v230, %v234
      %v238 = vcombine.low %v228, %v235
      %v240 = vunpack.c.l.s4 1983009808
      %v241 = vunpack.c.0.s8 %v240
      %v242 = vlaneseq
      %v243 = vshrl.u32 %v242, 7
      %v244 = vsub.s32 %v241, %v243
      %v245 = vrot.slane %v238, %v244
      %246 = vrot.lane.b32.xlu0 %v245, 15
      %v247 = vpop.permute.xlu0 %246
      %v248 = vrot.slane %v247, 6
      %vm249 = vcmask 121856
      %v250 = vsel %vm249, %v248, %v247
      %v252 = vmul.bf16 %v198, %v250
      %v253 = vld [vmem:[%s1] sm:$0xf]
      %s254 = scalar_lea.vmem %s1, 4
      %v255 = vld [vmem:[%s254] sm:$0xf]
      %v257 = vcombine.high %v198, %v198
      %v259 = vunpack.c.l.s4 1983009808
      %v260 = vunpack.c.0.s8 %v259
      %v261 = vlaneseq
      %v262 = vshrl.u32 %v261, 7
      %v263 = vsub.s32 %v260, %v262
      %v264 = vrot.slane %v198, %v263
      %v266 = vunpack.c.l.s4 1983009808
      %v267 = vunpack.c.0.s8 %v266
      %v268 = vlaneseq
      %v269 = vshrl.u32 %v268, 7
      %v270 = vsub.s32 %v267, %v269
      %v271 = vrot.slane %v257, %v270
      %v272 = vcombine.high %v264, %v264
      %273 = vrot.lane.b32.xlu0 %v264, 112
      %v274 = vpop.permute.xlu0 %273
      %275 = vrot.lane.b32.xlu0 %v272, 112
      %v276 = vpop.permute.xlu0 %275
      %277 = vrot.lane.b32.xlu0 %v271, 112
      %v278 = vpop.permute.xlu0 %277
      %vm279 = vcmask 916480
      %v280 = vsel %vm279, %v274, %v276
      %v281 = vsel %vm279, %v276, %v278
      %vm282 = vcmask 31744
      %v284 = vsel %vm282, %v255, 0
      %vm286 = vcmask 1041408
      %v288 = vsel %vm286, %v280, 0
      %v291 = vsel %vm286, %v281, 0
      %293 = vmatprep.subr.bf16.mxu0 %v291
      %294 = vmatpush1.bf16.msra.mxu0 %v288
      %295 = vmatprep.subr.bf16.mxu0 0
      %296 = vmatpush1.bf16.msra.mxu0 0
      %297 = vmatprep.subr.bf16.mxu0 0
      %298 = vmatpush1.bf16.msra.mxu0 0
      %299 = vmatprep.subr.bf16.mxu0 0
      %300 = vmatpush1.bf16.msra.mxu0 0
      %301 = vmatprep.subr.bf16.mxu0 0
      %302 = vmatpush1.bf16.msra.mxu0 0
      %303 = vmatprep.subr.bf16.mxu0 0
      %304 = vmatpush1.bf16.msra.mxu0 0
      %305 = vmatprep.subr.bf16.mxu0 0
      %306 = vmatpush1.bf16.msra.mxu0 0
      %307 = vmatprep.subr.bf16.mxu0 0
      %308 = vmatpush1.bf16.msra.mxu0 0
      %309 = vmatprep.subr.bf16.mxu0 0
      %310 = vmatpush1.bf16.msra.mxu0 0
      %311 = vmatprep.subr.bf16.mxu0 0
      %312 = vmatpush1.bf16.msra.mxu0 0
      %313 = vmatprep.subr.bf16.mxu0 0
      %314 = vmatpush1.bf16.msra.mxu0 0
      %315 = vmatprep.subr.bf16.mxu0 0
      %316 = vmatpush1.bf16.msra.mxu0 0
      %317 = vmatprep.subr.bf16.mxu0 0
      %318 = vmatpush1.bf16.msra.mxu0 0
      %319 = vmatprep.subr.bf16.mxu0 0
      %320 = vmatpush1.bf16.msra.mxu0 0
      %321 = vmatprep.subr.bf16.mxu0 0
      %322 = vmatpush1.bf16.msra.mxu0 0
      %323 = vmatprep.subr.bf16.mxu0 0
      %324 = vmatpush1.bf16.msra.mxu0 0
      %325 = vmatprep.mubr.bf16.mxu0 0
      %326 = vmatmul.mubr.bf16.gmra.mrb[0].mxu0 %v284
      %v327 = vpop.f32.mrb[0].mxu0
      %v328 = vadd.f32 0.0, %v327
      %v329 = vpop.f32.mrb[0].mxu0
      %v330 = vadd.f32 0.0, %v329
      %v331 = vpop.f32.mrb[0].mxu0
      %v332 = vpop.f32.mrb[0].mxu0
      %333 = vdwg.mxu0
      %v335 = vcombine.high %v252, %v252
      %v337 = vunpack.c.l.s4 1983009808
      %v338 = vunpack.c.0.s8 %v337
      %v339 = vlaneseq
      %v340 = vshrl.u32 %v339, 7
      %v341 = vsub.s32 %v338, %v340
      %v342 = vrot.slane %v252, %v341
      %v344 = vunpack.c.l.s4 1983009808
      %v345 = vunpack.c.0.s8 %v344
      %v346 = vlaneseq
      %v347 = vshrl.u32 %v346, 7
      %v348 = vsub.s32 %v345, %v347
      %v349 = vrot.slane %v335, %v348
      %v350 = vcombine.high %v342, %v342
      %351 = vrot.lane.b32.xlu0 %v342, 113
      %v352 = vpop.permute.xlu0 %351
      %353 = vrot.lane.b32.xlu0 %v350, 113
      %v354 = vpop.permute.xlu0 %353
      %355 = vrot.lane.b32.xlu0 %v349, 113
      %v356 = vpop.permute.xlu0 %355
      %vm357 = vcmask 924672
      %v358 = vsel %vm357, %v352, %v354
      %v359 = vsel %vm357, %v354, %v356
      %v361 = vsel %vm282, %v253, 0
      %v364 = vsel %vm286, %v358, 0
      %v367 = vsel %vm286, %v359, 0
      %369 = vmatprep.subr.bf16.mxu0 %v367
      %370 = vmatpush1.bf16.msra.mxu0 %v364
      %371 = vmatprep.subr.bf16.mxu0 0
      %372 = vmatpush1.bf16.msra.mxu0 0
      %373 = vmatprep.subr.bf16.mxu0 0
      %374 = vmatpush1.bf16.msra.mxu0 0
      %375 = vmatprep.subr.bf16.mxu0 0
      %376 = vmatpush1.bf16.msra.mxu0 0
      %377 = vmatprep.subr.bf16.mxu0 0
      %378 = vmatpush1.bf16.msra.mxu0 0
      %379 = vmatprep.subr.bf16.mxu0 0
      %380 = vmatpush1.bf16.msra.mxu0 0
      %381 = vmatprep.subr.bf16.mxu0 0
      %382 = vmatpush1.bf16.msra.mxu0 0
      %383 = vmatprep.subr.bf16.mxu0 0
      %384 = vmatpush1.bf16.msra.mxu0 0
      %385 = vmatprep.subr.bf16.mxu0 0
      %386 = vmatpush1.bf16.msra.mxu0 0
      %387 = vmatprep.subr.bf16.mxu0 0
      %388 = vmatpush1.bf16.msra.mxu0 0
      %389 = vmatprep.subr.bf16.mxu0 0
      %390 = vmatpush1.bf16.msra.mxu0 0
      %391 = vmatprep.subr.bf16.mxu0 0
      %392 = vmatpush1.bf16.msra.mxu0 0
      %393 = vmatprep.subr.bf16.mxu0 0
      %394 = vmatpush1.bf16.msra.mxu0 0
      %395 = vmatprep.subr.bf16.mxu0 0
      %396 = vmatpush1.bf16.msra.mxu0 0
      %397 = vmatprep.subr.bf16.mxu0 0
      %398 = vmatpush1.bf16.msra.mxu0 0
      %399 = vmatprep.subr.bf16.mxu0 0
      %400 = vmatpush1.bf16.msra.mxu0 0
      %401 = vmatprep.mubr.bf16.mxu0 0
      %402 = vmatmul.mubr.bf16.gmra.mrb[0].mxu0 %v361
      %v403 = vpop.f32.mrb[0].mxu0
      %v404 = vadd.f32 %v328, %v403
      %v405 = vpop.f32.mrb[0].mxu0
      %v406 = vadd.f32 %v330, %v405
      %v407 = vpop.f32.mrb[0].mxu0
      %v408 = vpop.f32.mrb[0].mxu0
      %409 = vdwg.mxu0
      %v410 = vld [vmem:[%s191] sm:$0x3f]
      %v411 = vshrl.u32 %v214, 16
      %v412 = vpack.i.b16 %v411, %v411
      %v414 = vlaneseq
      %v415 = vshrl.u32 %v414, 7
      %v416 = vsub.s32 0, %v415
      %v417 = vrot.slane %v412, %v416
      %v418 = vshrl.u32 %v221, 16
      %v419 = vpack.i.b16 %v418, %v418
      %v421 = vlaneseq
      %v422 = vshrl.u32 %v421, 7
      %v423 = vsub.s32 0, %v422
      %v424 = vrot.slane %v419, %v423
      %v427 = vcombine.low %v417, %v424
      %v429 = vunpack.c.l.s4 1983009808
      %v430 = vunpack.c.0.s8 %v429
      %v431 = vlaneseq
      %v432 = vshrl.u32 %v431, 7
      %v433 = vsub.s32 %v430, %v432
      %v434 = vrot.slane %v427, %v433
      %435 = vrot.lane.b32.xlu0 %v434, 17
      %v436 = vpop.permute.xlu0 %435
      %v437 = vrot.slane %v436, 6
      %vm438 = vcmask 138240
      %v439 = vsel %vm438, %v437, %v436
      %v441 = vmul.bf16 %v410, %v439
      %s442 = scalar_lea.vmem %s1, 8
      %v443 = vld [vmem:[%s442] sm:$0xf]
      %v445 = vcombine.high %v441, %v441
      %v447 = vunpack.c.l.s4 1983009808
      %v448 = vunpack.c.0.s8 %v447
      %v449 = vlaneseq
      %v450 = vshrl.u32 %v449, 7
      %v451 = vsub.s32 %v448, %v450
      %v452 = vrot.slane %v441, %v451
      %v454 = vunpack.c.l.s4 1983009808
      %v455 = vunpack.c.0.s8 %v454
      %v456 = vlaneseq
      %v457 = vshrl.u32 %v456, 7
      %v458 = vsub.s32 %v455, %v457
      %v459 = vrot.slane %v445, %v458
      %v460 = vcombine.high %v452, %v452
      %461 = vrot.lane.b32.xlu0 %v452, 111
      %v462 = vpop.permute.xlu0 %461
      %463 = vrot.lane.b32.xlu0 %v460, 111
      %v464 = vpop.permute.xlu0 %463
      %465 = vrot.lane.b32.xlu0 %v459, 111
      %v466 = vpop.permute.xlu0 %465
      %vm467 = vcmask 908288
      %v468 = vsel %vm467, %v462, %v464
      %v469 = vsel %vm467, %v464, %v466
      %v471 = vsel %vm282, %v443, 0
      %v474 = vsel %vm286, %v468, 0
      %v477 = vsel %vm286, %v469, 0
      %479 = vmatprep.subr.bf16.mxu0 %v477
      %480 = vmatpush1.bf16.msra.mxu0 %v474
      %481 = vmatprep.subr.bf16.mxu0 0
      %482 = vmatpush1.bf16.msra.mxu0 0
      %483 = vmatprep.subr.bf16.mxu0 0
      %484 = vmatpush1.bf16.msra.mxu0 0
      %485 = vmatprep.subr.bf16.mxu0 0
      %486 = vmatpush1.bf16.msra.mxu0 0
      %487 = vmatprep.subr.bf16.mxu0 0
      %488 = vmatpush1.bf16.msra.mxu0 0
      %489 = vmatprep.subr.bf16.mxu0 0
      %490 = vmatpush1.bf16.msra.mxu0 0
      %491 = vmatprep.subr.bf16.mxu0 0
      %492 = vmatpush1.bf16.msra.mxu0 0
      %493 = vmatprep.subr.bf16.mxu0 0
      %494 = vmatpush1.bf16.msra.mxu0 0
      %495 = vmatprep.subr.bf16.mxu0 0
      %496 = vmatpush1.bf16.msra.mxu0 0
      %497 = vmatprep.subr.bf16.mxu0 0
      %498 = vmatpush1.bf16.msra.mxu0 0
      %499 = vmatprep.subr.bf16.mxu0 0
      %500 = vmatpush1.bf16.msra.mxu0 0
      %501 = vmatprep.subr.bf16.mxu0 0
      %502 = vmatpush1.bf16.msra.mxu0 0
      %503 = vmatprep.subr.bf16.mxu0 0
      %504 = vmatpush1.bf16.msra.mxu0 0
      %505 = vmatprep.subr.bf16.mxu0 0
      %506 = vmatpush1.bf16.msra.mxu0 0
      %507 = vmatprep.subr.bf16.mxu0 0
      %508 = vmatpush1.bf16.msra.mxu0 0
      %509 = vmatprep.subr.bf16.mxu0 0
      %510 = vmatpush1.bf16.msra.mxu0 0
      %511 = vmatprep.mubr.bf16.mxu0 0
      %512 = vmatmul.mubr.bf16.gmra.mrb[0].mxu0 %v471
      %v513 = vpop.f32.mrb[0].mxu0
      %v514 = vadd.f32 0.0, %v513
      %v515 = vpop.f32.mrb[0].mxu0
      %v516 = vadd.f32 0.0, %v515
      %v517 = vpop.f32.mrb[0].mxu0
      %v518 = vpop.f32.mrb[0].mxu0
      %519 = vdwg.mxu0
      %v520 = vadd.f32 %v404, %v514
      %v521 = vadd.f32 %v406, %v516
      %v522 = vld [vmem:[%s191] sm:$0x3f]
      %523 = vrot.lane.b32.xlu0 %v245, 31
      %v524 = vpop.permute.xlu0 %523
      %v525 = vrot.slane %v524, 6
      %vm526 = vcmask 252928
      %v527 = vsel %vm526, %v525, %v524
      %v529 = vmul.bf16 %v522, %v527
      %s530 = scalar_lea.vmem %s1, 12
      %v531 = vld [vmem:[%s530] sm:$0xf]
      %v533 = vcombine.high %v529, %v529
      %v535 = vunpack.c.l.s4 1983009808
      %v536 = vunpack.c.0.s8 %v535
      %v537 = vlaneseq
      %v538 = vshrl.u32 %v537, 7
      %v539 = vsub.s32 %v536, %v538
      %v540 = vrot.slane %v529, %v539
      %v542 = vunpack.c.l.s4 1983009808
      %v543 = vunpack.c.0.s8 %v542
      %v544 = vlaneseq
      %v545 = vshrl.u32 %v544, 7
      %v546 = vsub.s32 %v543, %v545
      %v547 = vrot.slane %v533, %v546
      %v548 = vcombine.high %v540, %v540
      %549 = vrot.lane.b32.xlu0 %v540, 97
      %v550 = vpop.permute.xlu0 %549
      %551 = vrot.lane.b32.xlu0 %v548, 97
      %v552 = vpop.permute.xlu0 %551
      %553 = vrot.lane.b32.xlu0 %v547, 97
      %v554 = vpop.permute.xlu0 %553
      %vm555 = vcmask 793600
      %v556 = vsel %vm555, %v550, %v552
      %v557 = vsel %vm555, %v552, %v554
      %v559 = vsel %vm282, %v531, 0
      %v562 = vsel %vm286, %v556, 0
      %v565 = vsel %vm286, %v557, 0
      %567 = vmatprep.subr.bf16.mxu0 %v565
      %568 = vmatpush1.bf16.msra.mxu0 %v562
      %569 = vmatprep.subr.bf16.mxu0 0
      %570 = vmatpush1.bf16.msra.mxu0 0
      %571 = vmatprep.subr.bf16.mxu0 0
      %572 = vmatpush1.bf16.msra.mxu0 0
      %573 = vmatprep.subr.bf16.mxu0 0
      %574 = vmatpush1.bf16.msra.mxu0 0
      %575 = vmatprep.subr.bf16.mxu0 0
      %576 = vmatpush1.bf16.msra.mxu0 0
      %577 = vmatprep.subr.bf16.mxu0 0
      %578 = vmatpush1.bf16.msra.mxu0 0
      %579 = vmatprep.subr.bf16.mxu0 0
      %580 = vmatpush1.bf16.msra.mxu0 0
      %581 = vmatprep.subr.bf16.mxu0 0
      %582 = vmatpush1.bf16.msra.mxu0 0
      %583 = vmatprep.subr.bf16.mxu0 0
      %584 = vmatpush1.bf16.msra.mxu0 0
      %585 = vmatprep.subr.bf16.mxu0 0
      %586 = vmatpush1.bf16.msra.mxu0 0
      %587 = vmatprep.subr.bf16.mxu0 0
      %588 = vmatpush1.bf16.msra.mxu0 0
      %589 = vmatprep.subr.bf16.mxu0 0
      %590 = vmatpush1.bf16.msra.mxu0 0
      %591 = vmatprep.subr.bf16.mxu0 0
      %592 = vmatpush1.bf16.msra.mxu0 0
      %593 = vmatprep.subr.bf16.mxu0 0
      %594 = vmatpush1.bf16.msra.mxu0 0
      %595 = vmatprep.subr.bf16.mxu0 0
      %596 = vmatpush1.bf16.msra.mxu0 0
      %597 = vmatprep.subr.bf16.mxu0 0
      %598 = vmatpush1.bf16.msra.mxu0 0
      %599 = vmatprep.mubr.bf16.mxu0 0
      %600 = vmatmul.mubr.bf16.gmra.mrb[0].mxu0 %v559
      %v601 = vpop.f32.mrb[0].mxu0
      %v602 = vadd.f32 0.0, %v601
      %v603 = vpop.f32.mrb[0].mxu0
      %v604 = vadd.f32 0.0, %v603
      %v605 = vpop.f32.mrb[0].mxu0
      %v606 = vpop.f32.mrb[0].mxu0
      %607 = vdwg.mxu0
      %v608 = vadd.f32 %v520, %v602
      %v609 = vadd.f32 %v521, %v604
      %v610 = vld [vmem:[%s191] sm:$0x3f]
      %s611 = scalar_lea.vmem %s1, 16
      %v612 = vld [vmem:[%s611] sm:$0xf]
      %v614 = vcombine.high %v610, %v610
      %v616 = vunpack.c.l.s4 1983009808
      %v617 = vunpack.c.0.s8 %v616
      %v618 = vlaneseq
      %v619 = vshrl.u32 %v618, 7
      %v620 = vsub.s32 %v617, %v619
      %v621 = vrot.slane %v610, %v620
      %v623 = vunpack.c.l.s4 1983009808
      %v624 = vunpack.c.0.s8 %v623
      %v625 = vlaneseq
      %v626 = vshrl.u32 %v625, 7
      %v627 = vsub.s32 %v624, %v626
      %v628 = vrot.slane %v614, %v627
      %v629 = vcombine.high %v621, %v621
      %630 = vrot.lane.b32.xlu0 %v621, 96
      %v631 = vpop.permute.xlu0 %630
      %632 = vrot.lane.b32.xlu0 %v629, 96
      %v633 = vpop.permute.xlu0 %632
      %634 = vrot.lane.b32.xlu0 %v628, 96
      %v635 = vpop.permute.xlu0 %634
      %vm636 = vcmask 785408
      %v637 = vsel %vm636, %v631, %v633
      %v638 = vsel %vm636, %v633, %v635
      %v640 = vsel %vm282, %v612, 0
      %v643 = vsel %vm286, %v637, 0
      %v646 = vsel %vm286, %v638, 0
      %648 = vmatprep.subr.bf16.mxu0 %v646
      %649 = vmatpush1.bf16.msra.mxu0 %v643
      %650 = vmatprep.subr.bf16.mxu0 0
      %651 = vmatpush1.bf16.msra.mxu0 0
      %652 = vmatprep.subr.bf16.mxu0 0
      %653 = vmatpush1.bf16.msra.mxu0 0
      %654 = vmatprep.subr.bf16.mxu0 0
      %655 = vmatpush1.bf16.msra.mxu0 0
      %656 = vmatprep.subr.bf16.mxu0 0
      %657 = vmatpush1.bf16.msra.mxu0 0
      %658 = vmatprep.subr.bf16.mxu0 0
      %659 = vmatpush1.bf16.msra.mxu0 0
      %660 = vmatprep.subr.bf16.mxu0 0
      %661 = vmatpush1.bf16.msra.mxu0 0
      %662 = vmatprep.subr.bf16.mxu0 0
      %663 = vmatpush1.bf16.msra.mxu0 0
      %664 = vmatprep.subr.bf16.mxu0 0
      %665 = vmatpush1.bf16.msra.mxu0 0
      %666 = vmatprep.subr.bf16.mxu0 0
      %667 = vmatpush1.bf16.msra.mxu0 0
      %668 = vmatprep.subr.bf16.mxu0 0
      %669 = vmatpush1.bf16.msra.mxu0 0
      %670 = vmatprep.subr.bf16.mxu0 0
      %671 = vmatpush1.bf16.msra.mxu0 0
      %672 = vmatprep.subr.bf16.mxu0 0
      %673 = vmatpush1.bf16.msra.mxu0 0
      %674 = vmatprep.subr.bf16.mxu0 0
      %675 = vmatpush1.bf16.msra.mxu0 0
      %676 = vmatprep.subr.bf16.mxu0 0
      %677 = vmatpush1.bf16.msra.mxu0 0
      %678 = vmatprep.subr.bf16.mxu0 0
      %679 = vmatpush1.bf16.msra.mxu0 0
      %680 = vmatprep.mubr.bf16.mxu0 0
      %681 = vmatmul.mubr.bf16.gmra.mrb[0].mxu0 %v640
      %v682 = vpop.f32.mrb[0].mxu0
      %v683 = vadd.f32 0.0, %v682
      %v684 = vpop.f32.mrb[0].mxu0
      %v685 = vadd.f32 0.0, %v684
      %v686 = vpop.f32.mrb[0].mxu0
      %v687 = vpop.f32.mrb[0].mxu0
      %688 = vdwg.mxu0
      %v689 = vadd.f32 %v608, %v683
      %v690 = vadd.f32 %v609, %v685
      %v691 = vld [vmem:[%s191] sm:$0x3f]
      %692 = vrot.lane.b32.xlu0 %v434, 33
      %v693 = vpop.permute.xlu0 %692
      %v694 = vrot.slane %v693, 6
      %vm695 = vcmask 269312
      %v696 = vsel %vm695, %v694, %v693
      %v698 = vmul.bf16 %v691, %v696
      %s699 = scalar_lea.vmem %s1, 20
      %v700 = vld [vmem:[%s699] sm:$0xf]
      %v702 = vcombine.high %v698, %v698
      %v704 = vunpack.c.l.s4 1983009808
      %v705 = vunpack.c.0.s8 %v704
      %v706 = vlaneseq
      %v707 = vshrl.u32 %v706, 7
      %v708 = vsub.s32 %v705, %v707
      %v709 = vrot.slane %v698, %v708
      %v711 = vunpack.c.l.s4 1983009808
      %v712 = vunpack.c.0.s8 %v711
      %v713 = vlaneseq
      %v714 = vshrl.u32 %v713, 7
      %v715 = vsub.s32 %v712, %v714
      %v716 = vrot.slane %v702, %v715
      %v717 = vcombine.high %v709, %v709
      %718 = vrot.lane.b32.xlu0 %v709, 95
      %v719 = vpop.permute.xlu0 %718
      %720 = vrot.lane.b32.xlu0 %v717, 95
      %v721 = vpop.permute.xlu0 %720
      %722 = vrot.lane.b32.xlu0 %v716, 95
      %v723 = vpop.permute.xlu0 %722
      %vm724 = vcmask 777216
      %v725 = vsel %vm724, %v719, %v721
      %v726 = vsel %vm724, %v721, %v723
      %v728 = vsel %vm282, %v700, 0
      %v731 = vsel %vm286, %v725, 0
      %v734 = vsel %vm286, %v726, 0
      %736 = vmatprep.subr.bf16.mxu0 %v734
      %737 = vmatpush1.bf16.msra.mxu0 %v731
      %738 = vmatprep.subr.bf16.mxu0 0
      %739 = vmatpush1.bf16.msra.mxu0 0
      %740 = vmatprep.subr.bf16.mxu0 0
      %741 = vmatpush1.bf16.msra.mxu0 0
      %742 = vmatprep.subr.bf16.mxu0 0
      %743 = vmatpush1.bf16.msra.mxu0 0
      %744 = vmatprep.subr.bf16.mxu0 0
      %745 = vmatpush1.bf16.msra.mxu0 0
      %746 = vmatprep.subr.bf16.mxu0 0
      %747 = vmatpush1.bf16.msra.mxu0 0
      %748 = vmatprep.subr.bf16.mxu0 0
      %749 = vmatpush1.bf16.msra.mxu0 0
      %750 = vmatprep.subr.bf16.mxu0 0
      %751 = vmatpush1.bf16.msra.mxu0 0
      %752 = vmatprep.subr.bf16.mxu0 0
      %753 = vmatpush1.bf16.msra.mxu0 0
      %754 = vmatprep.subr.bf16.mxu0 0
      %755 = vmatpush1.bf16.msra.mxu0 0
      %756 = vmatprep.subr.bf16.mxu0 0
      %757 = vmatpush1.bf16.msra.mxu0 0
      %758 = vmatprep.subr.bf16.mxu0 0
      %759 = vmatpush1.bf16.msra.mxu0 0
      %760 = vmatprep.subr.bf16.mxu0 0
      %761 = vmatpush1.bf16.msra.mxu0 0
      %762 = vmatprep.subr.bf16.mxu0 0
      %763 = vmatpush1.bf16.msra.mxu0 0
      %764 = vmatprep.subr.bf16.mxu0 0
      %765 = vmatpush1.bf16.msra.mxu0 0
      %766 = vmatprep.subr.bf16.mxu0 0
      %767 = vmatpush1.bf16.msra.mxu0 0
      %768 = vmatprep.mubr.bf16.mxu0 0
      %769 = vmatmul.mubr.bf16.gmra.mrb[0].mxu0 %v728
      %v770 = vpop.f32.mrb[0].mxu0
      %v771 = vadd.f32 0.0, %v770
      %v772 = vpop.f32.mrb[0].mxu0
      %v773 = vadd.f32 0.0, %v772
      %v774 = vpop.f32.mrb[0].mxu0
      %v775 = vpop.f32.mrb[0].mxu0
      %776 = vdwg.mxu0
      %v777 = vadd.f32 %v689, %v771
      %v778 = vadd.f32 %v690, %v773
      %v779 = vld [vmem:[%s191] sm:$0x3f]
      %780 = vrot.lane.b32.xlu0 %v245, 47
      %v781 = vpop.permute.xlu0 %780
      %v782 = vrot.slane %v781, 6
      %vm783 = vcmask 384000
      %v784 = vsel %vm783, %v782, %v781
      %v786 = vmul.bf16 %v779, %v784
      %s787 = scalar_lea.vmem %s1, 24
      %v788 = vld [vmem:[%s787] sm:$0xf]
      %v790 = vcombine.high %v786, %v786
      %v792 = vunpack.c.l.s4 1983009808
      %v793 = vunpack.c.0.s8 %v792
      %v794 = vlaneseq
      %v795 = vshrl.u32 %v794, 7
      %v796 = vsub.s32 %v793, %v795
      %v797 = vrot.slane %v786, %v796
      %v799 = vunpack.c.l.s4 1983009808
      %v800 = vunpack.c.0.s8 %v799
      %v801 = vlaneseq
      %v802 = vshrl.u32 %v801, 7
      %v803 = vsub.s32 %v800, %v802
      %v804 = vrot.slane %v790, %v803
      %v805 = vcombine.high %v797, %v797
      %806 = vrot.lane.b32.xlu0 %v797, 81
      %v807 = vpop.permute.xlu0 %806
      %808 = vrot.lane.b32.xlu0 %v805, 81
      %v809 = vpop.permute.xlu0 %808
      %810 = vrot.lane.b32.xlu0 %v804, 81
      %v811 = vpop.permute.xlu0 %810
      %vm812 = vcmask 662528
      %v813 = vsel %vm812, %v807, %v809
      %v814 = vsel %vm812, %v809, %v811
      %v816 = vsel %vm282, %v788, 0
      %v819 = vsel %vm286, %v813, 0
      %v822 = vsel %vm286, %v814, 0
      %824 = vmatprep.subr.bf16.mxu0 %v822
      %825 = vmatpush1.bf16.msra.mxu0 %v819
      %826 = vmatprep.subr.bf16.mxu0 0
      %827 = vmatpush1.bf16.msra.mxu0 0
      %828 = vmatprep.subr.bf16.mxu0 0
      %829 = vmatpush1.bf16.msra.mxu0 0
      %830 = vmatprep.subr.bf16.mxu0 0
      %831 = vmatpush1.bf16.msra.mxu0 0
      %832 = vmatprep.subr.bf16.mxu0 0
      %833 = vmatpush1.bf16.msra.mxu0 0
      %834 = vmatprep.subr.bf16.mxu0 0
      %835 = vmatpush1.bf16.msra.mxu0 0
      %836 = vmatprep.subr.bf16.mxu0 0
      %837 = vmatpush1.bf16.msra.mxu0 0
      %838 = vmatprep.subr.bf16.mxu0 0
      %839 = vmatpush1.bf16.msra.mxu0 0
      %840 = vmatprep.subr.bf16.mxu0 0
      %841 = vmatpush1.bf16.msra.mxu0 0
      %842 = vmatprep.subr.bf16.mxu0 0
      %843 = vmatpush1.bf16.msra.mxu0 0
      %844 = vmatprep.subr.bf16.mxu0 0
      %845 = vmatpush1.bf16.msra.mxu0 0
      %846 = vmatprep.subr.bf16.mxu0 0
      %847 = vmatpush1.bf16.msra.mxu0 0
      %848 = vmatprep.subr.bf16.mxu0 0
      %849 = vmatpush1.bf16.msra.mxu0 0
      %850 = vmatprep.subr.bf16.mxu0 0
      %851 = vmatpush1.bf16.msra.mxu0 0
      %852 = vmatprep.subr.bf16.mxu0 0
      %853 = vmatpush1.bf16.msra.mxu0 0
      %854 = vmatprep.subr.bf16.mxu0 0
      %855 = vmatpush1.bf16.msra.mxu0 0
      %856 = vmatprep.mubr.bf16.mxu0 0
      %857 = vmatmul.mubr.bf16.gmra.mrb[0].mxu0 %v816
      %v858 = vpop.f32.mrb[0].mxu0
      %v859 = vadd.f32 0.0, %v858
      %v860 = vpop.f32.mrb[0].mxu0
      %v861 = vadd.f32 0.0, %v860
      %v862 = vpop.f32.mrb[0].mxu0
      %v863 = vpop.f32.mrb[0].mxu0
      %864 = vdwg.mxu0
      %v865 = vadd.f32 %v777, %v859
      %v866 = vadd.f32 %v778, %v861
      %v867 = vld [vmem:[%s191] sm:$0x3f]
      %s868 = scalar_lea.vmem %s1, 28
      %v869 = vld [vmem:[%s868] sm:$0xf]
      %v871 = vcombine.high %v867, %v867
      %v873 = vunpack.c.l.s4 1983009808
      %v874 = vunpack.c.0.s8 %v873
      %v875 = vlaneseq
      %v876 = vshrl.u32 %v875, 7
      %v877 = vsub.s32 %v874, %v876
      %v878 = vrot.slane %v867, %v877
      %v880 = vunpack.c.l.s4 1983009808
      %v881 = vunpack.c.0.s8 %v880
      %v882 = vlaneseq
      %v883 = vshrl.u32 %v882, 7
      %v884 = vsub.s32 %v881, %v883
      %v885 = vrot.slane %v871, %v884
      %v886 = vcombine.high %v878, %v878
      %887 = vrot.lane.b32.xlu0 %v878, 80
      %v888 = vpop.permute.xlu0 %887
      %889 = vrot.lane.b32.xlu0 %v886, 80
      %v890 = vpop.permute.xlu0 %889
      %891 = vrot.lane.b32.xlu0 %v885, 80
      %v892 = vpop.permute.xlu0 %891
      %vm893 = vcmask 654336
      %v894 = vsel %vm893, %v888, %v890
      %v895 = vsel %vm893, %v890, %v892
      %v897 = vsel %vm282, %v869, 0
      %v900 = vsel %vm286, %v894, 0
      %v903 = vsel %vm286, %v895, 0
      %905 = vmatprep.subr.bf16.mxu0 %v903
      %906 = vmatpush1.bf16.msra.mxu0 %v900
      %907 = vmatprep.subr.bf16.mxu0 0
      %908 = vmatpush1.bf16.msra.mxu0 0
      %909 = vmatprep.subr.bf16.mxu0 0
      %910 = vmatpush1.bf16.msra.mxu0 0
      %911 = vmatprep.subr.bf16.mxu0 0
      %912 = vmatpush1.bf16.msra.mxu0 0
      %913 = vmatprep.subr.bf16.mxu0 0
      %914 = vmatpush1.bf16.msra.mxu0 0
      %915 = vmatprep.subr.bf16.mxu0 0
      %916 = vmatpush1.bf16.msra.mxu0 0
      %917 = vmatprep.subr.bf16.mxu0 0
      %918 = vmatpush1.bf16.msra.mxu0 0
      %919 = vmatprep.subr.bf16.mxu0 0
      %920 = vmatpush1.bf16.msra.mxu0 0
      %921 = vmatprep.subr.bf16.mxu0 0
      %922 = vmatpush1.bf16.msra.mxu0 0
      %923 = vmatprep.subr.bf16.mxu0 0
      %924 = vmatpush1.bf16.msra.mxu0 0
      %925 = vmatprep.subr.bf16.mxu0 0
      %926 = vmatpush1.bf16.msra.mxu0 0
      %927 = vmatprep.subr.bf16.mxu0 0
      %928 = vmatpush1.bf16.msra.mxu0 0
      %929 = vmatprep.subr.bf16.mxu0 0
      %930 = vmatpush1.bf16.msra.mxu0 0
      %931 = vmatprep.subr.bf16.mxu0 0
      %932 = vmatpush1.bf16.msra.mxu0 0
      %933 = vmatprep.subr.bf16.mxu0 0
      %934 = vmatpush1.bf16.msra.mxu0 0
      %935 = vmatprep.subr.bf16.mxu0 0
      %936 = vmatpush1.bf16.msra.mxu0 0
      %937 = vmatprep.mubr.bf16.mxu0 0
      %938 = vmatmul.mubr.bf16.gmra.mrb[0].mxu0 %v897
      %v939 = vpop.f32.mrb[0].mxu0
      %v940 = vadd.f32 0.0, %v939
      %v941 = vpop.f32.mrb[0].mxu0
      %v942 = vadd.f32 0.0, %v941
      %v943 = vpop.f32.mrb[0].mxu0
      %v944 = vpop.f32.mrb[0].mxu0
      %945 = vdwg.mxu0
      %v946 = vadd.f32 %v865, %v940
      %v947 = vadd.f32 %v866, %v942
      %v948 = vld [vmem:[%s191] sm:$0x3f]
      %949 = vrot.lane.b32.xlu0 %v434, 49
      %v950 = vpop.permute.xlu0 %949
      %v951 = vrot.slane %v950, 6
      %vm952 = vcmask 400384
      %v953 = vsel %vm952, %v951, %v950
      %v955 = vmul.bf16 %v948, %v953
      %s956 = scalar_lea.vmem %s1, 32
      %v957 = vld [vmem:[%s956] sm:$0xf]
      %v959 = vcombine.high %v955, %v955
      %v961 = vunpack.c.l.s4 1983009808
      %v962 = vunpack.c.0.s8 %v961
      %v963 = vlaneseq
      %v964 = vshrl.u32 %v963, 7
      %v965 = vsub.s32 %v962, %v964
      %v966 = vrot.slane %v955, %v965
      %v968 = vunpack.c.l.s4 1983009808
      %v969 = vunpack.c.0.s8 %v968
      %v970 = vlaneseq
      %v971 = vshrl.u32 %v970, 7
      %v972 = vsub.s32 %v969, %v971
      %v973 = vrot.slane %v959, %v972
      %v974 = vcombine.high %v966, %v966
      %975 = vrot.lane.b32.xlu0 %v966, 79
      %v976 = vpop.permute.xlu0 %975
      %977 = vrot.lane.b32.xlu0 %v974, 79
      %v978 = vpop.permute.xlu0 %977
      %979 = vrot.lane.b32.xlu0 %v973, 79
      %v980 = vpop.permute.xlu0 %979
      %vm981 = vcmask 646144
      %v982 = vsel %vm981, %v976, %v978
      %v983 = vsel %vm981, %v978, %v980
      %v985 = vsel %vm282, %v957, 0
      %v988 = vsel %vm286, %v982, 0
      %v991 = vsel %vm286, %v983, 0
      %993 = vmatprep.subr.bf16.mxu0 %v991
      %994 = vmatpush1.bf16.msra.mxu0 %v988
      %995 = vmatprep.subr.bf16.mxu0 0
      %996 = vmatpush1.bf16.msra.mxu0 0
      %997 = vmatprep.subr.bf16.mxu0 0
      %998 = vmatpush1.bf16.msra.mxu0 0
      %999 = vmatprep.subr.bf16.mxu0 0
      %1000 = vmatpush1.bf16.msra.mxu0 0
      %1001 = vmatprep.subr.bf16.mxu0 0
      %1002 = vmatpush1.bf16.msra.mxu0 0
      %1003 = vmatprep.subr.bf16.mxu0 0
      %1004 = vmatpush1.bf16.msra.mxu0 0
      %1005 = vmatprep.subr.bf16.mxu0 0
      %1006 = vmatpush1.bf16.msra.mxu0 0
      %1007 = vmatprep.subr.bf16.mxu0 0
      %1008 = vmatpush1.bf16.msra.mxu0 0
      %1009 = vmatprep.subr.bf16.mxu0 0
      %1010 = vmatpush1.bf16.msra.mxu0 0
      %1011 = vmatprep.subr.bf16.mxu0 0
      %1012 = vmatpush1.bf16.msra.mxu0 0
      %1013 = vmatprep.subr.bf16.mxu0 0
      %1014 = vmatpush1.bf16.msra.mxu0 0
      %1015 = vmatprep.subr.bf16.mxu0 0
      %1016 = vmatpush1.bf16.msra.mxu0 0
      %1017 = vmatprep.subr.bf16.mxu0 0
      %1018 = vmatpush1.bf16.msra.mxu0 0
      %1019 = vmatprep.subr.bf16.mxu0 0
      %1020 = vmatpush1.bf16.msra.mxu0 0
      %1021 = vmatprep.subr.bf16.mxu0 0
      %1022 = vmatpush1.bf16.msra.mxu0 0
      %1023 = vmatprep.subr.bf16.mxu0 0
      %1024 = vmatpush1.bf16.msra.mxu0 0
      %1025 = vmatprep.mubr.bf16.mxu0 0
      %1026 = vmatmul.mubr.bf16.gmra.mrb[0].mxu0 %v985
      %v1027 = vpop.f32.mrb[0].mxu0
      %v1028 = vadd.f32 0.0, %v1027
      %v1029 = vpop.f32.mrb[0].mxu0
      %v1030 = vadd.f32 0.0, %v1029
      %v1031 = vpop.f32.mrb[0].mxu0
      %v1032 = vpop.f32.mrb[0].mxu0
      %1033 = vdwg.mxu0
      %v1034 = vadd.f32 %v946, %v1028
      %v1035 = vadd.f32 %v947, %v1030
      %v1036 = vld [vmem:[%s2] sm:$0xff]
      %1038 = vset.pattern.permute.xlu0 0
      %1039 = vperm.xlu0 %1038, %v1036
      %v1040 = vpop.permute.xlu0 %1039
      %v1042 = vadd.f32 %v1034, %v1040
      %v1043 = vadd.f32 %v1035, %v1040
      %v1044 = vmax.f32 %v1042, 0.0
      %v1045 = vmax.f32 %v1043, 0.0
      %v1046 = vadd.f32 %v1044, %v1045
      %1047 = vadd.xlane.f32.xlu0 %v1046
      %v1048 = vpop.xlane.xlu0 %1047
      %v1049 = vmul.f32 %v1048, 0.00390625
      %vm1050 = vcmask 7168
      %1051 = vst.msk [vmem:[%s195] sm:$0xff] %vm1050, %v1049
      %p1052 = scmp.lt.s32.totalorder %s15, 1
      %s1053 = scalar_select %p1052, %s15, 1
      %s1054 = smul.addr %s1053, 8
      %s1055 = scalar_lea.vmem %s4, %s1054
      // Predicated region
      $region37: #{model_output_logits_wrapper_forward.1} parent=35 // pred_check
        %p1056 = pneg %p122
      $region38: #{model_output_logits_wrapper_forward.1} parent=35 // pred_check_branch
        %1058 = sbr.rel (%p1056) target = $region40
      $region39: #{model_output_logits_wrapper_forward.1} parent=35 // pred_region
        _
      $region40: #{model_output_logits_wrapper_forward.1} parent=35 // pred_fallthru
        _
    $region36: #{model_output_logits_wrapper_forward.1} parent=5 // pred_fallthru
      _
    %p1059 = scmp.le.s32.totalorder 2, %s10
    // Predicated region
    $region41: #{model_output_logits_wrapper_forward.1} parent=5 // pred_check
      %p1060 = pneg %p1059
    $region42: #{model_output_logits_wrapper_forward.1} parent=5 // pred_check_branch
      %1062 = sbr.rel (%p1060) target = $region44
    $region43: #{model_output_logits_wrapper_forward.1} parent=5 // pred_region
      %s1063 = ssub.s32 %s10, 2
      // Predicated region
      $region45: #{model_output_logits_wrapper_forward.1} parent=43 // pred_check
        %p1064 = pneg %p128
      $region46: #{model_output_logits_wrapper_forward.1} parent=43 // pred_check_branch
        %1066 = sbr.rel (%p1064) target = $region48
      $region47: #{model_output_logits_wrapper_forward.1} parent=43 // pred_region
        %p1067 = scmp.lt.s32.totalorder %s16, 1
        %s1068 = scalar_select %p1067, %s16, 1
        %s1069 = smul.addr %s1068, 8
        %s1070 = scalar_lea.vmem %s4, %s1069
      $region48: #{model_output_logits_wrapper_forward.1} parent=43 // pred_fallthru
        _
    $region44: #{model_output_logits_wrapper_forward.1} parent=5 // pred_fallthru
      _
  $region6: #{model_output_logits_wrapper_forward.1} parent=0 // loop_footer
    %s14 = sadd.s32 1, %s10
  $region7: #{model_output_logits_wrapper_forward.1} parent=0 // loop_footer_branch
    %9 = sbr.rel target = $region3
  $region8: #{model_output_logits_wrapper_forward.1} parent=0 // loop_exit
    _

</llo_original>
